<compile_context>
chip_gen: v7x
topology: tpu7x:2x2x1
jax: 0.10.0
libtpu: 0.0.40
codegen_flags: <defaults>
</compile_context>

<pallas_src>
import numpy as np
import jax
import jax.numpy as jnp
from jax.experimental import pallas as pl
from jax.experimental.pallas import tpu as pltpu


# ----------------------------------------------------------------------------
# Kernel
# ----------------------------------------------------------------------------
def gmr_kernel(x_ref, w1_ref, b1_ref, w2_ref, b2_ref,
               wf1_ref, bf1_ref, wf2_ref, bf2_ref, out_ref):
    f32 = jnp.float32

    # conv1 (1->16, 3x3, pad 1) + ReLU as ONE dense matmul.
    # Output lane = (w%2)*512 + (y%2)*256 + (y//2)*64 + (w//2)*16 + c
    h1 = jnp.maximum(
        jnp.dot(x_ref[...], w1_ref[...], preferred_element_type=f32)
        + b1_ref[...], 0.0)                                   # [TB, 1024]

    # pool1 (2x2 max): two vreg-aligned maxima thanks to the lane layout above.
    m1 = jnp.maximum(h1[:, :512], h1[:, 512:])                # max over w parity
    p1 = jnp.maximum(m1[:, :256], m1[:, 256:])                # max over y parity
    # p1 lane = i*64 + j*16 + c  (i<3 valid, i==3 lanes are zero)

    # conv2 (16->32, 3x3, pad 1) + ReLU, only the 8 positions pool2 needs.
    # Output lane = (oj%2)*256 + oi*128 + (oj//2)*32 + co
    h2 = jnp.maximum(
        jnp.dot(p1, w2_ref[...], preferred_element_type=f32)
        + b2_ref[...], 0.0)                                   # [TB, 512]

    # pool2 (2x2 max, floor): two vreg-aligned maxima.
    m2 = jnp.maximum(h2[:, :256], h2[:, 256:])                # max over oj parity
    flat = jnp.maximum(m2[:, :128], m2[:, 128:])              # max over oi
    # flat lane = w*32 + co for lanes 0..63 ; lanes 64..127 are zero padding.

    # fc1 + ReLU (+ dropout = identity at inference) and fc2 (padded to 8 cols).
    # TODO(synk): nn.Dropout(p=0.1) is identity in eval mode; train-mode RNG
    # masking is intentionally not implemented.
    z = jnp.maximum(
        jnp.dot(flat, wf1_ref[...], preferred_element_type=f32)
        + bf1_ref[...], 0.0)                                  # [TB, 128]
    out_ref[...] = (jnp.dot(z, wf2_ref[...], preferred_element_type=f32)
                    + bf2_ref[...]).astype(out_ref.dtype)     # [TB, 8]


# ----------------------------------------------------------------------------
# Host-side weight packing (pure glue; lane layouts chosen for the kernel)
# ----------------------------------------------------------------------------
def _col1(y, w):
    return (w % 2) * 512 + (y % 2) * 256 + (y // 2) * 64 + (w // 2) * 16


def _col2(oi, oj):
    return (oj % 2) * 256 + oi * 128 + (oj // 2) * 32


def pack_params(params):
    w1, b1, w2, b2, wf1, bf1, wf2, bf2 = [np.asarray(p, np.float32) for p in params]

    # conv1 as [48 in] x [1024 out] dense matmul (zero padding baked in).
    W1 = np.zeros((48, 1024), np.float32)
    B1 = np.zeros((1, 1024), np.float32)
    for y in range(6):
        for w in range(8):
            base = _col1(y, w)
            B1[0, base:base + 16] = b1
            for dy in range(3):
                for dx in range(3):
                    yi, xi = y + dy - 1, w + dx - 1
                    if 0 <= yi < 6 and 0 <= xi < 8:
                        W1[yi * 8 + xi, base:base + 16] = w1[:, 0, dy, dx]

    # conv2 as [256 in (pool1 layout)] x [512 out] dense matmul; only the
    # 8 output positions (oi in {0,1}, oj in {0..3}) that pool2 keeps.
    W2 = np.zeros((256, 512), np.float32)
    B2 = np.zeros((1, 512), np.float32)
    for oi in range(2):
        for oj in range(4):
            cbase = _col2(oi, oj)
            B2[0, cbase:cbase + 32] = b2
            for dy in range(3):
                for dx in range(3):
                    pi, pj = oi + dy - 1, oj + dx - 1
                    if 0 <= pi < 3 and 0 <= pj < 4:
                        rbase = pi * 64 + pj * 16
                        W2[rbase:rbase + 16, cbase:cbase + 32] = w2[:, :, dy, dx].T

    # fc1: kernel flat lane = w*32 + c  <->  PyTorch flat index t = c*2 + w.
    Wf1 = np.zeros((128, 128), np.float32)
    Bf1 = np.zeros((1, 128), np.float32)
    for w in range(2):
        for c in range(32):
            Wf1[w * 32 + c, :64] = wf1[:, c * 2 + w]
    Bf1[0, :64] = bf1

    # fc2, output padded to 8 lanes (wrapper slices back to 3).
    Wf2 = np.zeros((128, 8), np.float32)
    Bf2 = np.zeros((1, 8), np.float32)
    Wf2[:64, :3] = wf2.T
    Bf2[0, :3] = bf2

    return tuple(jnp.asarray(a) for a in (W1, B1, W2, B2, Wf1, Bf1, Wf2, Bf2))


# ----------------------------------------------------------------------------
# Wrapper
# ----------------------------------------------------------------------------
def gmr_forward(x, packed, *, batch_tile=512):
    """x: [B, 6, 8] float32 -> [B, 3, 1] float32 (matches PyTorch forward)."""
    W1, B1, W2, B2, Wf1, Bf1, Wf2, Bf2 = packed
    bsz = x.shape[0]
    x2 = x.reshape(bsz, 48).astype(jnp.float32)     # free host reshape (row-major)

    tb = batch_tile if bsz >= batch_tile else ((bsz + 7) // 8) * 8
    bp = ((bsz + tb - 1) // tb) * tb
    if bp != bsz:
        x2 = jnp.concatenate([x2, jnp.zeros((bp - bsz, 48), jnp.float32)], axis=0)
    nb = bp // tb

    def const(shape):
        return pl.BlockSpec(shape, lambda i: (0, 0))

    out = pl.pallas_call(
        gmr_kernel,
        out_shape=jax.ShapeDtypeStruct((bp, 8), jnp.float32),
        grid=(nb,),
        in_specs=[
            pl.BlockSpec((tb, 48), lambda i: (i, 0)),
            const((48, 1024)), const((1, 1024)),
            const((256, 512)), const((1, 512)),
            const((128, 128)), const((1, 128)),
            const((128, 8)),   const((1, 8)),
        ],
        out_specs=pl.BlockSpec((tb, 8), lambda i: (i, 0)),
        compiler_params=pltpu.CompilerParams(
            dimension_semantics=("parallel",)),
    )(x2, W1, B1, W2, B2, Wf1, Bf1, Wf2, Bf2)

    return out[:bsz, :3][:, :, None]


# ----------------------------------------------------------------------------
# Pure-JAX reference (mirrors the PyTorch module exactly, NCHW)
# ----------------------------------------------------------------------------
def reference_forward(x, params):
    w1, b1, w2, b2, wf1, bf1, wf2, bf2 = params
    y = x[:, None, :, :]
    y = jax.lax.conv_general_dilated(y, w1, (1, 1), ((1, 1), (1, 1)),
                                     dimension_numbers=('NCHW', 'OIHW', 'NCHW'))
    y = jnp.maximum(y + b1[None, :, None, None], 0.0)
    y = jax.lax.reduce_window(y, -jnp.inf, jax.lax.max, (1, 1, 2, 2), (1, 1, 2, 2), 'VALID')
    y = jax.lax.conv_general_dilated(y, w2, (1, 1), ((1, 1), (1, 1)),
                                     dimension_numbers=('NCHW', 'OIHW', 'NCHW'))
    y = jnp.maximum(y + b2[None, :, None, None], 0.0)
    y = jax.lax.reduce_window(y, -jnp.inf, jax.lax.max, (1, 1, 2, 2), (1, 1, 2, 2), 'VALID')
    y = y.reshape(y.shape[0], -1)
    y = jnp.maximum(y @ wf1.T + bf1, 0.0)
    y = y @ wf2.T + bf2
    return y[:, :, None]


def init_params(key):
    ks = jax.random.split(key, 8)
    f32 = jnp.float32
    w1 = 0.2 * jax.random.normal(ks[0], (16, 1, 3, 3), f32)
    b1 = 0.1 * jax.random.normal(ks[1], (16,), f32)
    w2 = 0.2 * jax.random.normal(ks[2], (32, 16, 3, 3), f32)
    b2 = 0.1 * jax.random.normal(ks[3], (32,), f32)
    wf1 = 0.2 * jax.random.normal(ks[4], (64, 64), f32)
    bf1 = 0.1 * jax.random.normal(ks[5], (64,), f32)
    wf2 = 0.2 * jax.random.normal(ks[6], (3, 64), f32)
    bf2 = 0.1 * jax.random.normal(ks[7], (3,), f32)
    return (w1, b1, w2, b2, wf1, bf1, wf2, bf2)


if __name__ == "__main__":
    key = jax.random.PRNGKey(0)
    kx, kp = jax.random.split(key)
    B = 2
    x = jax.random.normal(kx, (B, 6, 8), jnp.float32)
    params = init_params(kp)
    packed = pack_params(params)

    out = jax.block_until_ready(gmr_forward(x, packed))
    assert out.shape == (B, 3, 1), out.shape

    ref = jax.block_until_ready(reference_forward(x, params))
    max_err = float(jnp.max(jnp.abs(out - ref)))
    if max_err > 5e-4:
        raise AssertionError(f"kernel mismatch vs reference, max abs err = {max_err}")

    print("KERNEL_OK")
</pallas_src>

<mosaic_0001>
module attributes {stable_mosaic.version = 11 : i64} {
  func.func @gmr_kernel(%arg0: i32, %arg1: memref<8x48xf32, #tpu.memory_space<vmem>>, %arg2: memref<48x1024xf32, #tpu.memory_space<vmem>>, %arg3: memref<1x1024xf32, #tpu.memory_space<vmem>>, %arg4: memref<256x512xf32, #tpu.memory_space<vmem>>, %arg5: memref<1x512xf32, #tpu.memory_space<vmem>>, %arg6: memref<128x128xf32, #tpu.memory_space<vmem>>, %arg7: memref<1x128xf32, #tpu.memory_space<vmem>>, %arg8: memref<128x8xf32, #tpu.memory_space<vmem>>, %arg9: memref<1x8xf32, #tpu.memory_space<vmem>>, %arg10: memref<8x8xf32, #tpu.memory_space<vmem>>) attributes {dimension_semantics = [#tpu.dimension_semantics<parallel>], iteration_bounds = array<i64: 1>, scalar_prefetch = 0 : i64, scratch_operands = 0 : i64, tpu.core_type = #tpu.core_type<tc>, window_params = [{transform_indices = @transform_0, window_bounds = array<i64: 8, 48>}, {pipeline_mode = #tpu.pipeline_mode<synchronous>, transform_indices = @transform_1, window_bounds = array<i64: 48, 1024>}, {pipeline_mode = #tpu.pipeline_mode<synchronous>, transform_indices = @transform_2, window_bounds = array<i64: 1, 1024>}, {pipeline_mode = #tpu.pipeline_mode<synchronous>, transform_indices = @transform_3, window_bounds = array<i64: 256, 512>}, {pipeline_mode = #tpu.pipeline_mode<synchronous>, transform_indices = @transform_4, window_bounds = array<i64: 1, 512>}, {pipeline_mode = #tpu.pipeline_mode<synchronous>, transform_indices = @transform_5, window_bounds = array<i64: 128, 128>}, {pipeline_mode = #tpu.pipeline_mode<synchronous>, transform_indices = @transform_6, window_bounds = array<i64: 1, 128>}, {pipeline_mode = #tpu.pipeline_mode<synchronous>, transform_indices = @transform_7, window_bounds = array<i64: 128, 8>}, {pipeline_mode = #tpu.pipeline_mode<synchronous>, transform_indices = @transform_8, window_bounds = array<i64: 1, 8>}, {transform_indices = @transform_9, window_bounds = array<i64: 8, 8>}]} {
    %c0 = arith.constant 0 : index
    %c0_0 = arith.constant 0 : index
    %0 = vector.load %arg1[%c0, %c0_0] : memref<8x48xf32, #tpu.memory_space<vmem>>, vector<8x48xf32>
    %c0_1 = arith.constant 0 : index
    %c0_2 = arith.constant 0 : index
    %1 = vector.load %arg2[%c0_1, %c0_2] : memref<48x1024xf32, #tpu.memory_space<vmem>>, vector<48x1024xf32>
    %cst = arith.constant dense<0.000000e+00> : vector<8x1024xf32>
    %2 = tpu.matmul %0, %1, %cst {dimension_numbers = #tpu.dot_dimension_numbers<[1], [0], [0], [1], [0, 0, 1, 1], [], []>} : vector<8x48xf32>, vector<48x1024xf32>, vector<8x1024xf32> -> vector<8x1024xf32>
    %c0_3 = arith.constant 0 : index
    %c0_4 = arith.constant 0 : index
    %3 = vector.load %arg3[%c0_3, %c0_4] : memref<1x1024xf32, #tpu.memory_space<vmem>>, vector<1x1024xf32>
    %4 = vector.broadcast %3 : vector<1x1024xf32> to vector<8x1024xf32>
    %5 = arith.addf %2, %4 : vector<8x1024xf32>
    %cst_5 = arith.constant 0.000000e+00 : f32
    %6 = vector.broadcast %cst_5 : f32 to vector<8x1024xf32>
    %7 = arith.maximumf %5, %6 : vector<8x1024xf32>
    %8 = vector.extract_strided_slice %7 {offsets = [0, 0], sizes = [8, 512], strides = [1, 1]} : vector<8x1024xf32> to vector<8x512xf32>
    %9 = vector.extract_strided_slice %7 {offsets = [0, 512], sizes = [8, 512], strides = [1, 1]} : vector<8x1024xf32> to vector<8x512xf32>
    %10 = arith.maximumf %8, %9 : vector<8x512xf32>
    %11 = vector.extract_strided_slice %10 {offsets = [0, 0], sizes = [8, 256], strides = [1, 1]} : vector<8x512xf32> to vector<8x256xf32>
    %12 = vector.extract_strided_slice %10 {offsets = [0, 256], sizes = [8, 256], strides = [1, 1]} : vector<8x512xf32> to vector<8x256xf32>
    %13 = arith.maximumf %11, %12 : vector<8x256xf32>
    %c0_6 = arith.constant 0 : index
    %c0_7 = arith.constant 0 : index
    %14 = vector.load %arg4[%c0_6, %c0_7] : memref<256x512xf32, #tpu.memory_space<vmem>>, vector<256x512xf32>
    %cst_8 = arith.constant dense<0.000000e+00> : vector<8x512xf32>
    %15 = tpu.matmul %13, %14, %cst_8 {dimension_numbers = #tpu.dot_dimension_numbers<[1], [0], [0], [1], [0, 0, 1, 1], [], []>} : vector<8x256xf32>, vector<256x512xf32>, vector<8x512xf32> -> vector<8x512xf32>
    %c0_9 = arith.constant 0 : index
    %c0_10 = arith.constant 0 : index
    %16 = vector.load %arg5[%c0_9, %c0_10] : memref<1x512xf32, #tpu.memory_space<vmem>>, vector<1x512xf32>
    %17 = vector.broadcast %16 : vector<1x512xf32> to vector<8x512xf32>
    %18 = arith.addf %15, %17 : vector<8x512xf32>
    %cst_11 = arith.constant 0.000000e+00 : f32
    %19 = vector.broadcast %cst_11 : f32 to vector<8x512xf32>
    %20 = arith.maximumf %18, %19 : vector<8x512xf32>
    %21 = vector.extract_strided_slice %20 {offsets = [0, 0], sizes = [8, 256], strides = [1, 1]} : vector<8x512xf32> to vector<8x256xf32>
    %22 = vector.extract_strided_slice %20 {offsets = [0, 256], sizes = [8, 256], strides = [1, 1]} : vector<8x512xf32> to vector<8x256xf32>
    %23 = arith.maximumf %21, %22 : vector<8x256xf32>
    %24 = vector.extract_strided_slice %23 {offsets = [0, 0], sizes = [8, 128], strides = [1, 1]} : vector<8x256xf32> to vector<8x128xf32>
    %25 = vector.extract_strided_slice %23 {offsets = [0, 128], sizes = [8, 128], strides = [1, 1]} : vector<8x256xf32> to vector<8x128xf32>
    %26 = arith.maximumf %24, %25 : vector<8x128xf32>
    %c0_12 = arith.constant 0 : index
    %c0_13 = arith.constant 0 : index
    %27 = vector.load %arg6[%c0_12, %c0_13] : memref<128x128xf32, #tpu.memory_space<vmem>>, vector<128x128xf32>
    %cst_14 = arith.constant dense<0.000000e+00> : vector<8x128xf32>
    %28 = tpu.matmul %26, %27, %cst_14 {dimension_numbers = #tpu.dot_dimension_numbers<[1], [0], [0], [1], [0, 0, 1, 1], [], []>} : vector<8x128xf32>, vector<128x128xf32>, vector<8x128xf32> -> vector<8x128xf32>
    %c0_15 = arith.constant 0 : index
    %c0_16 = arith.constant 0 : index
    %29 = vector.load %arg7[%c0_15, %c0_16] : memref<1x128xf32, #tpu.memory_space<vmem>>, vector<1x128xf32>
    %30 = vector.broadcast %29 : vector<1x128xf32> to vector<8x128xf32>
    %31 = arith.addf %28, %30 : vector<8x128xf32>
    %cst_17 = arith.constant 0.000000e+00 : f32
    %32 = vector.broadcast %cst_17 : f32 to vector<8x128xf32>
    %33 = arith.maximumf %31, %32 : vector<8x128xf32>
    %c0_18 = arith.constant 0 : index
    %c0_19 = arith.constant 0 : index
    %34 = vector.load %arg8[%c0_18, %c0_19] : memref<128x8xf32, #tpu.memory_space<vmem>>, vector<128x8xf32>
    %cst_20 = arith.constant dense<0.000000e+00> : vector<8x8xf32>
    %35 = tpu.matmul %33, %34, %cst_20 {dimension_numbers = #tpu.dot_dimension_numbers<[1], [0], [0], [1], [0, 0, 1, 1], [], []>} : vector<8x128xf32>, vector<128x8xf32>, vector<8x8xf32> -> vector<8x8xf32>
    %c0_21 = arith.constant 0 : index
    %c0_22 = arith.constant 0 : index
    %36 = vector.load %arg9[%c0_21, %c0_22] : memref<1x8xf32, #tpu.memory_space<vmem>>, vector<1x8xf32>
    %37 = vector.broadcast %36 : vector<1x8xf32> to vector<8x8xf32>
    %38 = arith.addf %35, %37 : vector<8x8xf32>
    %c0_23 = arith.constant 0 : index
    %c0_24 = arith.constant 0 : index
    %39 = vector.load %arg10[%c0_23, %c0_24] : memref<8x8xf32, #tpu.memory_space<vmem>>, vector<8x8xf32>
    tpu.vector_store %arg10[%c0_23, %c0_24], %38 {strides = array<i32>} : memref<8x8xf32, #tpu.memory_space<vmem>>, vector<8x8xf32>,
    return
  }
  func.func @transform_0(%arg0: i32) -> (i32, i32) {
    %c0_i32 = arith.constant 0 : i32
    %c0_i32_0 = arith.constant 0 : i32
    return %arg0, %c0_i32 : i32, i32
  }
  func.func @transform_1(%arg0: i32) -> (i32, i32) {
    %c0_i32 = arith.constant 0 : i32
    %c0_i32_0 = arith.constant 0 : i32
    %c0_i32_1 = arith.constant 0 : i32
    return %c0_i32, %c0_i32_0 : i32, i32
  }
  func.func @transform_2(%arg0: i32) -> (i32, i32) {
    %c0_i32 = arith.constant 0 : i32
    %c0_i32_0 = arith.constant 0 : i32
    %c0_i32_1 = arith.constant 0 : i32
    return %c0_i32, %c0_i32_0 : i32, i32
  }
  func.func @transform_3(%arg0: i32) -> (i32, i32) {
    %c0_i32 = arith.constant 0 : i32
    %c0_i32_0 = arith.constant 0 : i32
    %c0_i32_1 = arith.constant 0 : i32
    return %c0_i32, %c0_i32_0 : i32, i32
  }
  func.func @transform_4(%arg0: i32) -> (i32, i32) {
    %c0_i32 = arith.constant 0 : i32
    %c0_i32_0 = arith.constant 0 : i32
    %c0_i32_1 = arith.constant 0 : i32
    return %c0_i32, %c0_i32_0 : i32, i32
  }
  func.func @transform_5(%arg0: i32) -> (i32, i32) {
    %c0_i32 = arith.constant 0 : i32
    %c0_i32_0 = arith.constant 0 : i32
    %c0_i32_1 = arith.constant 0 : i32
    return %c0_i32, %c0_i32_0 : i32, i32
  }
  func.func @transform_6(%arg0: i32) -> (i32, i32) {
    %c0_i32 = arith.constant 0 : i32
    %c0_i32_0 = arith.constant 0 : i32
    %c0_i32_1 = arith.constant 0 : i32
    return %c0_i32, %c0_i32_0 : i32, i32
  }
  func.func @transform_7(%arg0: i32) -> (i32, i32) {
    %c0_i32 = arith.constant 0 : i32
    %c0_i32_0 = arith.constant 0 : i32
    %c0_i32_1 = arith.constant 0 : i32
    return %c0_i32, %c0_i32_0 : i32, i32
  }
  func.func @transform_8(%arg0: i32) -> (i32, i32) {
    %c0_i32 = arith.constant 0 : i32
    %c0_i32_0 = arith.constant 0 : i32
    %c0_i32_1 = arith.constant 0 : i32
    return %c0_i32, %c0_i32_0 : i32, i32
  }
  func.func @transform_9(%arg0: i32) -> (i32, i32) {
    %c0_i32 = arith.constant 0 : i32
    %c0_i32_0 = arith.constant 0 : i32
    return %arg0, %c0_i32 : i32, i32
  }
}

</mosaic_0001>

<llo_original>
// kernel: tpu_custom_call.1
$region0: #{tpu_custom_call.1}
  #allocation0 [shape = 'u32[]', space=smem, size = 0x4, offset = 0x4, fixed_abs, tag = 'smem constant byte address 0x4 - core index']
  #allocation1 [shape = 'u32[144,128]{1,0:T(1,128)}', space=vmem, size = 0x12000, scoped, tag = 'internal scratch']
  %s0 = inlined_call_operand.vmem [shape: f32[8,48], index: 0, kind: input, shape index: {}]
  %s1 = inlined_call_operand.hbm [shape: f32[48,1024], index: 1, kind: input, shape index: {}]
  %s2 = inlined_call_operand.vmem [shape: f32[1,1024], index: 2, kind: input, shape index: {}]
  %s3 = inlined_call_operand.hbm [shape: f32[256,512], index: 3, kind: input, shape index: {}]
  %s4 = inlined_call_operand.vmem [shape: f32[1,512], index: 4, kind: input, shape index: {}]
  %s5 = inlined_call_operand.vmem [shape: f32[128,128], index: 5, kind: input, shape index: {}]
  %s6 = inlined_call_operand.vmem [shape: f32[1,128], index: 6, kind: input, shape index: {}]
  %s7 = inlined_call_operand.vmem [shape: f32[128,8], index: 7, kind: input, shape index: {}]
  %s8 = inlined_call_operand.vmem [shape: f32[1,8], index: 8, kind: input, shape index: {}]
  %s9 = inlined_call_operand.hbm [shape: f32[8,8], index: 9, kind: output, shape index: {}]
  %s10 = sld [smem:[#allocation0]]
  $region54: #{tpu_custom_call.1} parent=0
    _
  %s12 = ssub.s32 1, %s10
  %s13 = scalar_select 0, %s12, %s10
  $region1: #{tpu_custom_call.1} parent=0
    #allocation2 [shape = 'u8[196608]{0}', space=vmem, size = 0x30000, scoped, tag = 'input window, operand 1, single buffered']
    #allocation3 [shape = 's32[1]{0}', space=sflag, size = 0x4, scoped, tag = 'scoped memory for tpu_custom_call.1']
    #allocation4 [shape = 's32[1]{0}', space=sflag, size = 0x4, scoped, tag = 'scoped memory for tpu_custom_call.1']
    #allocation5 [shape = 'u8[524288]{0}', space=vmem, size = 0x80000, scoped, tag = 'input window, operand 3, single buffered']
    #allocation6 [shape = 's32[1]{0}', space=sflag, size = 0x4, scoped, tag = 'scoped memory for tpu_custom_call.1']
    #allocation7 [shape = 'u8[4096]{0}', space=vmem, size = 0x1000, scoped, tag = 'output window, operand 0, single buffered']
    %14 = vsyncpa [#allocation3], 0
    %15 = vsyncpa [#allocation6], 0
    %16 = vsyncpa [#allocation4], 0
    // Predicated region
    $region2: #{tpu_custom_call.1} parent=1 // pred_check
      _
    $region3: #{tpu_custom_call.1} parent=1 // pred_check_branch
      %18 = sbr.rel (0) target = $region5
    $region4: #{tpu_custom_call.1} parent=1 // pred_region
      _
    $region5: #{tpu_custom_call.1} parent=1 // pred_fallthru
      _
    // Predicated region
    $region6: #{tpu_custom_call.1} parent=1 // pred_check
      _
    $region7: #{tpu_custom_call.1} parent=1 // pred_check_branch
      %20 = sbr.rel (0) target = $region9
    $region8: #{tpu_custom_call.1} parent=1 // pred_region
      %s22 = ssub.s32 6144, 6144
      %23 = vsyncadd [#allocation3], %s22
      %s24 = sshll.u32 [#allocation2], 4
      %s25 = int_to_ptr.vmem [resolvable:$true] %s24
      %30 = dma.hbm_to_vmem [thread:$0]  %s1, 6144, %s25, [#allocation3], 1024, 1024, 64
    $region9: #{tpu_custom_call.1} parent=1 // pred_fallthru
      _
    // Predicated region
    $region10: #{tpu_custom_call.1} parent=1 // pred_check
      _
    $region11: #{tpu_custom_call.1} parent=1 // pred_check_branch
      %32 = sbr.rel (0) target = $region13
    $region12: #{tpu_custom_call.1} parent=1 // pred_region
      _
    $region13: #{tpu_custom_call.1} parent=1 // pred_fallthru
      _
    // Predicated region
    $region14: #{tpu_custom_call.1} parent=1 // pred_check
      _
    $region15: #{tpu_custom_call.1} parent=1 // pred_check_branch
      %34 = sbr.rel (0) target = $region17
    $region16: #{tpu_custom_call.1} parent=1 // pred_region
      %s36 = ssub.s32 16384, 16384
      %37 = vsyncadd [#allocation6], %s36
      %s38 = sshll.u32 [#allocation5], 4
      %s39 = int_to_ptr.vmem [resolvable:$true] %s38
      %44 = dma.hbm_to_vmem [thread:$0]  %s3, 16384, %s39, [#allocation6], 512, 512, 32
    $region17: #{tpu_custom_call.1} parent=1 // pred_fallthru
      _
    // Predicated region
    $region18: #{tpu_custom_call.1} parent=1 // pred_check
      _
    $region19: #{tpu_custom_call.1} parent=1 // pred_check_branch
      %46 = sbr.rel (0) target = $region21
    $region20: #{tpu_custom_call.1} parent=1 // pred_region
      _
    $region21: #{tpu_custom_call.1} parent=1 // pred_fallthru
      _
    // Predicated region
    $region22: #{tpu_custom_call.1} parent=1 // pred_check
      _
    $region23: #{tpu_custom_call.1} parent=1 // pred_check_branch
      %48 = sbr.rel (0) target = $region25
    $region24: #{tpu_custom_call.1} parent=1 // pred_region
      _
    $region25: #{tpu_custom_call.1} parent=1 // pred_fallthru
      _
    // Predicated region
    $region26: #{tpu_custom_call.1} parent=1 // pred_check
      _
    $region27: #{tpu_custom_call.1} parent=1 // pred_check_branch
      %50 = sbr.rel (0) target = $region29
    $region28: #{tpu_custom_call.1} parent=1 // pred_region
      _
    $region29: #{tpu_custom_call.1} parent=1 // pred_fallthru
      _
    // Predicated region
    $region30: #{tpu_custom_call.1} parent=1 // pred_check
      _
    $region31: #{tpu_custom_call.1} parent=1 // pred_check_branch
      %52 = sbr.rel (0) target = $region33
    $region32: #{tpu_custom_call.1} parent=1 // pred_region
      _
    $region33: #{tpu_custom_call.1} parent=1 // pred_fallthru
      _
    // Predicated region
    $region34: #{tpu_custom_call.1} parent=1 // pred_check
      _
    $region35: #{tpu_custom_call.1} parent=1 // pred_check_branch
      %54 = sbr.rel (0) target = $region37
    $region36: #{tpu_custom_call.1} parent=1 // pred_region
      _
    $region37: #{tpu_custom_call.1} parent=1 // pred_fallthru
      _
    // Predicated region
    $region38: #{tpu_custom_call.1} parent=1 // pred_check
      _
    $region39: #{tpu_custom_call.1} parent=1 // pred_check_branch
      %56 = sbr.rel (0) target = $region41
    $region40: #{tpu_custom_call.1} parent=1 // pred_region
      %57 = dma.done [#allocation3], 6144
    $region41: #{tpu_custom_call.1} parent=1 // pred_fallthru
      _
    // Predicated region
    $region42: #{tpu_custom_call.1} parent=1 // pred_check
      _
    $region43: #{tpu_custom_call.1} parent=1 // pred_check_branch
      %59 = sbr.rel (0) target = $region45
    $region44: #{tpu_custom_call.1} parent=1 // pred_region
      %60 = dma.done [#allocation6], 16384
    $region45: #{tpu_custom_call.1} parent=1 // pred_fallthru
      _
    %v61 = vld [vmem:[%s0] sm:$0xff]
    %v62 = vld [vmem:[#allocation2] sm:$0xff]
    %v63 = vld [vmem:[#allocation2 + $0x8] sm:$0xff]
    %v64 = vld [vmem:[#allocation2 + $0x10] sm:$0xff]
    %v65 = vld [vmem:[#allocation2 + $0x18] sm:$0xff]
    %v66 = vld [vmem:[#allocation2 + $0x20] sm:$0xff]
    %v67 = vld [vmem:[#allocation2 + $0x28] sm:$0xff]
    %v68 = vld [vmem:[#allocation2 + $0x30] sm:$0xff]
    %v69 = vld [vmem:[#allocation2 + $0x38] sm:$0xff]
    %v70 = vld [vmem:[#allocation2 + $0x40] sm:$0xff]
    %v71 = vld [vmem:[#allocation2 + $0x48] sm:$0xff]
    %v72 = vld [vmem:[#allocation2 + $0x50] sm:$0xff]
    %v73 = vld [vmem:[#allocation2 + $0x58] sm:$0xff]
    %v74 = vld [vmem:[#allocation2 + $0x60] sm:$0xff]
    %v75 = vld [vmem:[#allocation2 + $0x68] sm:$0xff]
    %v76 = vld [vmem:[#allocation2 + $0x70] sm:$0xff]
    %v77 = vld [vmem:[#allocation2 + $0x78] sm:$0xff]
    %v78 = vld [vmem:[#allocation2 + $0x80] sm:$0xff]
    %v79 = vld [vmem:[#allocation2 + $0x88] sm:$0xff]
    %v80 = vld [vmem:[#allocation2 + $0x90] sm:$0xff]
    %v81 = vld [vmem:[#allocation2 + $0x98] sm:$0xff]
    %v82 = vld [vmem:[#allocation2 + $0xa0] sm:$0xff]
    %v83 = vld [vmem:[#allocation2 + $0xa8] sm:$0xff]
    %v84 = vld [vmem:[#allocation2 + $0xb0] sm:$0xff]
    %v85 = vld [vmem:[#allocation2 + $0xb8] sm:$0xff]
    %v86 = vld [vmem:[#allocation2 + $0xc0] sm:$0xff]
    %v87 = vld [vmem:[#allocation2 + $0xc8] sm:$0xff]
    %v88 = vld [vmem:[#allocation2 + $0xd0] sm:$0xff]
    %v89 = vld [vmem:[#allocation2 + $0xd8] sm:$0xff]
    %v90 = vld [vmem:[#allocation2 + $0xe0] sm:$0xff]
    %v91 = vld [vmem:[#allocation2 + $0xe8] sm:$0xff]
    %v92 = vld [vmem:[#allocation2 + $0xf0] sm:$0xff]
    %v93 = vld [vmem:[#allocation2 + $0xf8] sm:$0xff]
    %v94 = vld [vmem:[#allocation2 + $0x100] sm:$0xff]
    %v95 = vld [vmem:[#allocation2 + $0x108] sm:$0xff]
    %v96 = vld [vmem:[#allocation2 + $0x110] sm:$0xff]
    %v97 = vld [vmem:[#allocation2 + $0x118] sm:$0xff]
    %v98 = vld [vmem:[#allocation2 + $0x120] sm:$0xff]
    %v99 = vld [vmem:[#allocation2 + $0x128] sm:$0xff]
    %v100 = vld [vmem:[#allocation2 + $0x130] sm:$0xff]
    %v101 = vld [vmem:[#allocation2 + $0x138] sm:$0xff]
    %v102 = vld [vmem:[#allocation2 + $0x140] sm:$0xff]
    %v103 = vld [vmem:[#allocation2 + $0x148] sm:$0xff]
    %v104 = vld [vmem:[#allocation2 + $0x150] sm:$0xff]
    %v105 = vld [vmem:[#allocation2 + $0x158] sm:$0xff]
    %v106 = vld [vmem:[#allocation2 + $0x160] sm:$0xff]
    %v107 = vld [vmem:[#allocation2 + $0x168] sm:$0xff]
    %v108 = vld [vmem:[#allocation2 + $0x170] sm:$0xff]
    %v109 = vld [vmem:[#allocation2 + $0x178] sm:$0xff]
    %v110 = vld [vmem:[%s2] sm:$0xff]
    %v112 = vlaneseq
    %v113 = vshrl.u32 %v112, 7
    %v114 = vsub.s32 0, %v113
    %v115 = vrot.slane %v110, %v114
    %v116 = vlaneseq
    %v117 = vshrl.u32 %v116, 7
    %v118 = vsub.s32 1, %v117
    %v119 = vrot.slane %v110, %v118
    %v120 = vlaneseq
    %v121 = vshrl.u32 %v120, 7
    %v122 = vsub.s32 2, %v121
    %v123 = vrot.slane %v110, %v122
    %v124 = vlaneseq
    %v125 = vshrl.u32 %v124, 7
    %v126 = vsub.s32 3, %v125
    %v127 = vrot.slane %v110, %v126
    %v128 = vlaneseq
    %v129 = vshrl.u32 %v128, 7
    %v130 = vsub.s32 4, %v129
    %v131 = vrot.slane %v110, %v130
    %v132 = vlaneseq
    %v133 = vshrl.u32 %v132, 7
    %v134 = vsub.s32 5, %v133
    %v135 = vrot.slane %v110, %v134
    %v136 = vlaneseq
    %v137 = vshrl.u32 %v136, 7
    %v138 = vsub.s32 6, %v137
    %v139 = vrot.slane %v110, %v138
    %v140 = vlaneseq
    %v141 = vshrl.u32 %v140, 7
    %v142 = vsub.s32 7, %v141
    %v143 = vrot.slane %v110, %v142
    %vm152 = vcmask 392192
    %v154 = vsel %vm152, %v61, 0
    %156 = vmatprep.subr.mxu0 %v63
    %157 = vmatpush1.msra.mxu0 %v62
    %158 = vmatprep.subr.mxu0 %v71
    %159 = vmatpush1.msra.mxu0 %v70
    %160 = vmatprep.subr.mxu0 %v79
    %161 = vmatpush1.msra.mxu0 %v78
    %162 = vmatprep.subr.mxu0 %v87
    %163 = vmatpush1.msra.mxu0 %v86
    %164 = vmatprep.subr.mxu0 %v95
    %165 = vmatpush1.msra.mxu0 %v94
    %166 = vmatprep.subr.mxu0 %v103
    %167 = vmatpush1.msra.mxu0 %v102
    %168 = vmatprep.subr.mxu0 0.0
    %169 = vmatpush1.msra.mxu0 0.0
    %170 = vmatprep.subr.mxu0 0.0
    %171 = vmatpush1.msra.mxu0 0.0
    %172 = vmatprep.subr.mxu0 0.0
    %173 = vmatpush1.msra.mxu0 0.0
    %174 = vmatprep.subr.mxu0 0.0
    %175 = vmatpush1.msra.mxu0 0.0
    %176 = vmatprep.subr.mxu0 0.0
    %177 = vmatpush1.msra.mxu0 0.0
    %178 = vmatprep.subr.mxu0 0.0
    %179 = vmatpush1.msra.mxu0 0.0
    %180 = vmatprep.subr.mxu0 0.0
    %181 = vmatpush1.msra.mxu0 0.0
    %182 = vmatprep.subr.mxu0 0.0
    %183 = vmatpush1.msra.mxu0 0.0
    %184 = vmatprep.subr.mxu0 0.0
    %185 = vmatpush1.msra.mxu0 0.0
    %186 = vmatprep.subr.mxu0 0.0
    %187 = vmatpush1.msra.mxu0 0.0
    %188 = vmatprep.subr.mxu0 0.0
    %189 = vmatpush1.msra.mxu0 0.0
    %190 = vmatprep.subr.mxu0 0.0
    %191 = vmatpush1.msra.mxu0 0.0
    %192 = vmatprep.subr.mxu0 0.0
    %193 = vmatpush1.msra.mxu0 0.0
    %194 = vmatprep.subr.mxu0 0.0
    %195 = vmatpush1.msra.mxu0 0.0
    %196 = vmatprep.subr.mxu0 0.0
    %197 = vmatpush1.msra.mxu0 0.0
    %198 = vmatprep.subr.mxu0 0.0
    %199 = vmatpush1.msra.mxu0 0.0
    %200 = vmatprep.subr.mxu0 0.0
    %201 = vmatpush1.msra.mxu0 0.0
    %202 = vmatprep.subr.mxu0 0.0
    %203 = vmatpush1.msra.mxu0 0.0
    %204 = vmatprep.subr.mxu0 0.0
    %205 = vmatpush1.msra.mxu0 0.0
    %206 = vmatprep.subr.mxu0 0.0
    %207 = vmatpush1.msra.mxu0 0.0
    %208 = vmatprep.subr.mxu0 0.0
    %209 = vmatpush1.msra.mxu0 0.0
    %210 = vmatprep.subr.mxu0 0.0
    %211 = vmatpush1.msra.mxu0 0.0
    %212 = vmatprep.subr.mxu0 0.0
    %213 = vmatpush1.msra.mxu0 0.0
    %214 = vmatprep.subr.mxu0 0.0
    %215 = vmatpush1.msra.mxu0 0.0
    %216 = vmatprep.subr.mxu0 0.0
    %217 = vmatpush1.msra.mxu0 0.0
    %218 = vmatprep.subr.mxu0 0.0
    %219 = vmatpush1.msra.mxu0 0.0
    %220 = vmatprep.mubr.f32.mxu0 0.0
    %221 = vmatmul.mubr.f32.gmra.mrb[0].mxu0 %v154
    %v222 = vpop.f32.mrb[0].mxu0
    %v223 = vadd.f32 %v115, %v222
    %v224 = vpop.f32.mrb[0].mxu0
    %v225 = vadd.f32 %v119, %v224
    %226 = vdwg.mxu0
    %227 = vmatprep.subr.mxu0 %v65
    %228 = vmatpush1.msra.mxu0 %v64
    %229 = vmatprep.subr.mxu0 %v73
    %230 = vmatpush1.msra.mxu0 %v72
    %231 = vmatprep.subr.mxu0 %v81
    %232 = vmatpush1.msra.mxu0 %v80
    %233 = vmatprep.subr.mxu0 %v89
    %234 = vmatpush1.msra.mxu0 %v88
    %235 = vmatprep.subr.mxu0 %v97
    %236 = vmatpush1.msra.mxu0 %v96
    %237 = vmatprep.subr.mxu0 %v105
    %238 = vmatpush1.msra.mxu0 %v104
    %239 = vmatprep.subr.mxu0 0.0
    %240 = vmatpush1.msra.mxu0 0.0
    %241 = vmatprep.subr.mxu0 0.0
    %242 = vmatpush1.msra.mxu0 0.0
    %243 = vmatprep.subr.mxu0 0.0
    %244 = vmatpush1.msra.mxu0 0.0
    %245 = vmatprep.subr.mxu0 0.0
    %246 = vmatpush1.msra.mxu0 0.0
    %247 = vmatprep.subr.mxu0 0.0
    %248 = vmatpush1.msra.mxu0 0.0
    %249 = vmatprep.subr.mxu0 0.0
    %250 = vmatpush1.msra.mxu0 0.0
    %251 = vmatprep.subr.mxu0 0.0
    %252 = vmatpush1.msra.mxu0 0.0
    %253 = vmatprep.subr.mxu0 0.0
    %254 = vmatpush1.msra.mxu0 0.0
    %255 = vmatprep.subr.mxu0 0.0
    %256 = vmatpush1.msra.mxu0 0.0
    %257 = vmatprep.subr.mxu0 0.0
    %258 = vmatpush1.msra.mxu0 0.0
    %259 = vmatprep.subr.mxu0 0.0
    %260 = vmatpush1.msra.mxu0 0.0
    %261 = vmatprep.subr.mxu0 0.0
    %262 = vmatpush1.msra.mxu0 0.0
    %263 = vmatprep.subr.mxu0 0.0
    %264 = vmatpush1.msra.mxu0 0.0
    %265 = vmatprep.subr.mxu0 0.0
    %266 = vmatpush1.msra.mxu0 0.0
    %267 = vmatprep.subr.mxu0 0.0
    %268 = vmatpush1.msra.mxu0 0.0
    %269 = vmatprep.subr.mxu0 0.0
    %270 = vmatpush1.msra.mxu0 0.0
    %271 = vmatprep.subr.mxu0 0.0
    %272 = vmatpush1.msra.mxu0 0.0
    %273 = vmatprep.subr.mxu0 0.0
    %274 = vmatpush1.msra.mxu0 0.0
    %275 = vmatprep.subr.mxu0 0.0
    %276 = vmatpush1.msra.mxu0 0.0
    %277 = vmatprep.subr.mxu0 0.0
    %278 = vmatpush1.msra.mxu0 0.0
    %279 = vmatprep.subr.mxu0 0.0
    %280 = vmatpush1.msra.mxu0 0.0
    %281 = vmatprep.subr.mxu0 0.0
    %282 = vmatpush1.msra.mxu0 0.0
    %283 = vmatprep.subr.mxu0 0.0
    %284 = vmatpush1.msra.mxu0 0.0
    %285 = vmatprep.subr.mxu0 0.0
    %286 = vmatpush1.msra.mxu0 0.0
    %287 = vmatprep.subr.mxu0 0.0
    %288 = vmatpush1.msra.mxu0 0.0
    %289 = vmatprep.subr.mxu0 0.0
    %290 = vmatpush1.msra.mxu0 0.0
    %291 = vmatprep.mubr.f32.mxu0 0.0
    %292 = vmatmul.mubr.f32.gmra.mrb[0].mxu0 %v154
    %v293 = vpop.f32.mrb[0].mxu0
    %v294 = vadd.f32 %v123, %v293
    %v295 = vpop.f32.mrb[0].mxu0
    %v296 = vadd.f32 %v127, %v295
    %297 = vdwg.mxu0
    %298 = vmatprep.subr.mxu0 %v67
    %299 = vmatpush1.msra.mxu0 %v66
    %300 = vmatprep.subr.mxu0 %v75
    %301 = vmatpush1.msra.mxu0 %v74
    %302 = vmatprep.subr.mxu0 %v83
    %303 = vmatpush1.msra.mxu0 %v82
    %304 = vmatprep.subr.mxu0 %v91
    %305 = vmatpush1.msra.mxu0 %v90
    %306 = vmatprep.subr.mxu0 %v99
    %307 = vmatpush1.msra.mxu0 %v98
    %308 = vmatprep.subr.mxu0 %v107
    %309 = vmatpush1.msra.mxu0 %v106
    %310 = vmatprep.subr.mxu0 0.0
    %311 = vmatpush1.msra.mxu0 0.0
    %312 = vmatprep.subr.mxu0 0.0
    %313 = vmatpush1.msra.mxu0 0.0
    %314 = vmatprep.subr.mxu0 0.0
    %315 = vmatpush1.msra.mxu0 0.0
    %316 = vmatprep.subr.mxu0 0.0
    %317 = vmatpush1.msra.mxu0 0.0
    %318 = vmatprep.subr.mxu0 0.0
    %319 = vmatpush1.msra.mxu0 0.0
    %320 = vmatprep.subr.mxu0 0.0
    %321 = vmatpush1.msra.mxu0 0.0
    %322 = vmatprep.subr.mxu0 0.0
    %323 = vmatpush1.msra.mxu0 0.0
    %324 = vmatprep.subr.mxu0 0.0
    %325 = vmatpush1.msra.mxu0 0.0
    %326 = vmatprep.subr.mxu0 0.0
    %327 = vmatpush1.msra.mxu0 0.0
    %328 = vmatprep.subr.mxu0 0.0
    %329 = vmatpush1.msra.mxu0 0.0
    %330 = vmatprep.subr.mxu0 0.0
    %331 = vmatpush1.msra.mxu0 0.0
    %332 = vmatprep.subr.mxu0 0.0
    %333 = vmatpush1.msra.mxu0 0.0
    %334 = vmatprep.subr.mxu0 0.0
    %335 = vmatpush1.msra.mxu0 0.0
    %336 = vmatprep.subr.mxu0 0.0
    %337 = vmatpush1.msra.mxu0 0.0
    %338 = vmatprep.subr.mxu0 0.0
    %339 = vmatpush1.msra.mxu0 0.0
    %340 = vmatprep.subr.mxu0 0.0
    %341 = vmatpush1.msra.mxu0 0.0
    %342 = vmatprep.subr.mxu0 0.0
    %343 = vmatpush1.msra.mxu0 0.0
    %344 = vmatprep.subr.mxu0 0.0
    %345 = vmatpush1.msra.mxu0 0.0
    %346 = vmatprep.subr.mxu0 0.0
    %347 = vmatpush1.msra.mxu0 0.0
    %348 = vmatprep.subr.mxu0 0.0
    %349 = vmatpush1.msra.mxu0 0.0
    %350 = vmatprep.subr.mxu0 0.0
    %351 = vmatpush1.msra.mxu0 0.0
    %352 = vmatprep.subr.mxu0 0.0
    %353 = vmatpush1.msra.mxu0 0.0
    %354 = vmatprep.subr.mxu0 0.0
    %355 = vmatpush1.msra.mxu0 0.0
    %356 = vmatprep.subr.mxu0 0.0
    %357 = vmatpush1.msra.mxu0 0.0
    %358 = vmatprep.subr.mxu0 0.0
    %359 = vmatpush1.msra.mxu0 0.0
    %360 = vmatprep.subr.mxu0 0.0
    %361 = vmatpush1.msra.mxu0 0.0
    %362 = vmatprep.mubr.f32.mxu0 0.0
    %363 = vmatmul.mubr.f32.gmra.mrb[0].mxu0 %v154
    %v364 = vpop.f32.mrb[0].mxu0
    %v365 = vadd.f32 %v131, %v364
    %v366 = vpop.f32.mrb[0].mxu0
    %v367 = vadd.f32 %v135, %v366
    %368 = vdwg.mxu0
    %369 = vmatprep.subr.mxu0 %v69
    %370 = vmatpush1.msra.mxu0 %v68
    %371 = vmatprep.subr.mxu0 %v77
    %372 = vmatpush1.msra.mxu0 %v76
    %373 = vmatprep.subr.mxu0 %v85
    %374 = vmatpush1.msra.mxu0 %v84
    %375 = vmatprep.subr.mxu0 %v93
    %376 = vmatpush1.msra.mxu0 %v92
    %377 = vmatprep.subr.mxu0 %v101
    %378 = vmatpush1.msra.mxu0 %v100
    %379 = vmatprep.subr.mxu0 %v109
    %380 = vmatpush1.msra.mxu0 %v108
    %381 = vmatprep.subr.mxu0 0.0
    %382 = vmatpush1.msra.mxu0 0.0
    %383 = vmatprep.subr.mxu0 0.0
    %384 = vmatpush1.msra.mxu0 0.0
    %385 = vmatprep.subr.mxu0 0.0
    %386 = vmatpush1.msra.mxu0 0.0
    %387 = vmatprep.subr.mxu0 0.0
    %388 = vmatpush1.msra.mxu0 0.0
    %389 = vmatprep.subr.mxu0 0.0
    %390 = vmatpush1.msra.mxu0 0.0
    %391 = vmatprep.subr.mxu0 0.0
    %392 = vmatpush1.msra.mxu0 0.0
    %393 = vmatprep.subr.mxu0 0.0
    %394 = vmatpush1.msra.mxu0 0.0
    %395 = vmatprep.subr.mxu0 0.0
    %396 = vmatpush1.msra.mxu0 0.0
    %397 = vmatprep.subr.mxu0 0.0
    %398 = vmatpush1.msra.mxu0 0.0
    %399 = vmatprep.subr.mxu0 0.0
    %400 = vmatpush1.msra.mxu0 0.0
    %401 = vmatprep.subr.mxu0 0.0
    %402 = vmatpush1.msra.mxu0 0.0
    %403 = vmatprep.subr.mxu0 0.0
    %404 = vmatpush1.msra.mxu0 0.0
    %405 = vmatprep.subr.mxu0 0.0
    %406 = vmatpush1.msra.mxu0 0.0
    %407 = vmatprep.subr.mxu0 0.0
    %408 = vmatpush1.msra.mxu0 0.0
    %409 = vmatprep.subr.mxu0 0.0
    %410 = vmatpush1.msra.mxu0 0.0
    %411 = vmatprep.subr.mxu0 0.0
    %412 = vmatpush1.msra.mxu0 0.0
    %413 = vmatprep.subr.mxu0 0.0
    %414 = vmatpush1.msra.mxu0 0.0
    %415 = vmatprep.subr.mxu0 0.0
    %416 = vmatpush1.msra.mxu0 0.0
    %417 = vmatprep.subr.mxu0 0.0
    %418 = vmatpush1.msra.mxu0 0.0
    %419 = vmatprep.subr.mxu0 0.0
    %420 = vmatpush1.msra.mxu0 0.0
    %421 = vmatprep.subr.mxu0 0.0
    %422 = vmatpush1.msra.mxu0 0.0
    %423 = vmatprep.subr.mxu0 0.0
    %424 = vmatpush1.msra.mxu0 0.0
    %425 = vmatprep.subr.mxu0 0.0
    %426 = vmatpush1.msra.mxu0 0.0
    %427 = vmatprep.subr.mxu0 0.0
    %428 = vmatpush1.msra.mxu0 0.0
    %429 = vmatprep.subr.mxu0 0.0
    %430 = vmatpush1.msra.mxu0 0.0
    %431 = vmatprep.subr.mxu0 0.0
    %432 = vmatpush1.msra.mxu0 0.0
    %433 = vmatprep.mubr.f32.mxu0 0.0
    %434 = vmatmul.mubr.f32.gmra.mrb[0].mxu0 %v154
    %v435 = vpop.f32.mrb[0].mxu0
    %v436 = vadd.f32 %v139, %v435
    %v437 = vpop.f32.mrb[0].mxu0
    %v438 = vadd.f32 %v143, %v437
    %439 = vdwg.mxu0
    %v440 = vmax.f32 %v223, 0.0
    %v441 = vmax.f32 %v225, 0.0
    %v442 = vmax.f32 %v294, 0.0
    %v443 = vmax.f32 %v296, 0.0
    %v444 = vmax.f32 %v365, 0.0
    %v445 = vmax.f32 %v367, 0.0
    %v446 = vmax.f32 %v436, 0.0
    %v447 = vmax.f32 %v438, 0.0
    %v448 = vmax.f32 %v440, %v444
    %v449 = vmax.f32 %v441, %v445
    %v450 = vmax.f32 %v442, %v446
    %v451 = vmax.f32 %v443, %v447
    %v452 = vmax.f32 %v448, %v450
    %v453 = vmax.f32 %v449, %v451
    %v454 = vld [vmem:[#allocation5] sm:$0xff]
    %v455 = vld [vmem:[#allocation5 + $0x8] sm:$0xff]
    %v456 = vld [vmem:[#allocation5 + $0x10] sm:$0xff]
    %v457 = vld [vmem:[#allocation5 + $0x18] sm:$0xff]
    %v458 = vld [vmem:[#allocation5 + $0x20] sm:$0xff]
    %v459 = vld [vmem:[#allocation5 + $0x28] sm:$0xff]
    %v460 = vld [vmem:[#allocation5 + $0x30] sm:$0xff]
    %v461 = vld [vmem:[#allocation5 + $0x38] sm:$0xff]
    %v462 = vld [vmem:[#allocation5 + $0x40] sm:$0xff]
    %v463 = vld [vmem:[#allocation5 + $0x48] sm:$0xff]
    %v464 = vld [vmem:[#allocation5 + $0x50] sm:$0xff]
    %v465 = vld [vmem:[#allocation5 + $0x58] sm:$0xff]
    %v466 = vld [vmem:[#allocation5 + $0x60] sm:$0xff]
    %v467 = vld [vmem:[#allocation5 + $0x68] sm:$0xff]
    %v468 = vld [vmem:[#allocation5 + $0x70] sm:$0xff]
    %v469 = vld [vmem:[#allocation5 + $0x78] sm:$0xff]
    %v470 = vld [vmem:[#allocation5 + $0x80] sm:$0xff]
    %v471 = vld [vmem:[#allocation5 + $0x88] sm:$0xff]
    %v472 = vld [vmem:[#allocation5 + $0x90] sm:$0xff]
    %v473 = vld [vmem:[#allocation5 + $0x98] sm:$0xff]
    %v474 = vld [vmem:[#allocation5 + $0xa0] sm:$0xff]
    %v475 = vld [vmem:[#allocation5 + $0xa8] sm:$0xff]
    %v476 = vld [vmem:[#allocation5 + $0xb0] sm:$0xff]
    %v477 = vld [vmem:[#allocation5 + $0xb8] sm:$0xff]
    %v478 = vld [vmem:[#allocation5 + $0xc0] sm:$0xff]
    %v479 = vld [vmem:[#allocation5 + $0xc8] sm:$0xff]
    %v480 = vld [vmem:[#allocation5 + $0xd0] sm:$0xff]
    %v481 = vld [vmem:[#allocation5 + $0xd8] sm:$0xff]
    %v482 = vld [vmem:[#allocation5 + $0xe0] sm:$0xff]
    %v483 = vld [vmem:[#allocation5 + $0xe8] sm:$0xff]
    %v484 = vld [vmem:[#allocation5 + $0xf0] sm:$0xff]
    %v485 = vld [vmem:[#allocation5 + $0xf8] sm:$0xff]
    %v486 = vld [vmem:[#allocation5 + $0x100] sm:$0xff]
    %v487 = vld [vmem:[#allocation5 + $0x108] sm:$0xff]
    %v488 = vld [vmem:[#allocation5 + $0x110] sm:$0xff]
    %v489 = vld [vmem:[#allocation5 + $0x118] sm:$0xff]
    %v490 = vld [vmem:[#allocation5 + $0x120] sm:$0xff]
    %v491 = vld [vmem:[#allocation5 + $0x128] sm:$0xff]
    %v492 = vld [vmem:[#allocation5 + $0x130] sm:$0xff]
    %v493 = vld [vmem:[#allocation5 + $0x138] sm:$0xff]
    %v494 = vld [vmem:[#allocation5 + $0x140] sm:$0xff]
    %v495 = vld [vmem:[#allocation5 + $0x148] sm:$0xff]
    %v496 = vld [vmem:[#allocation5 + $0x150] sm:$0xff]
    %v497 = vld [vmem:[#allocation5 + $0x158] sm:$0xff]
    %v498 = vld [vmem:[#allocation5 + $0x160] sm:$0xff]
    %v499 = vld [vmem:[#allocation5 + $0x168] sm:$0xff]
    %v500 = vld [vmem:[#allocation5 + $0x170] sm:$0xff]
    %v501 = vld [vmem:[#allocation5 + $0x178] sm:$0xff]
    %v502 = vld [vmem:[#allocation5 + $0x180] sm:$0xff]
    %v503 = vld [vmem:[#allocation5 + $0x188] sm:$0xff]
    %v504 = vld [vmem:[#allocation5 + $0x190] sm:$0xff]
    %v505 = vld [vmem:[#allocation5 + $0x198] sm:$0xff]
    %v506 = vld [vmem:[#allocation5 + $0x1a0] sm:$0xff]
    %v507 = vld [vmem:[#allocation5 + $0x1a8] sm:$0xff]
    %v508 = vld [vmem:[#allocation5 + $0x1b0] sm:$0xff]
    %v509 = vld [vmem:[#allocation5 + $0x1b8] sm:$0xff]
    %v510 = vld [vmem:[#allocation5 + $0x1c0] sm:$0xff]
    %v511 = vld [vmem:[#allocation5 + $0x1c8] sm:$0xff]
    %v512 = vld [vmem:[#allocation5 + $0x1d0] sm:$0xff]
    %v513 = vld [vmem:[#allocation5 + $0x1d8] sm:$0xff]
    %v514 = vld [vmem:[#allocation5 + $0x1e0] sm:$0xff]
    %v515 = vld [vmem:[#allocation5 + $0x1e8] sm:$0xff]
    %v516 = vld [vmem:[#allocation5 + $0x1f0] sm:$0xff]
    %v517 = vld [vmem:[#allocation5 + $0x1f8] sm:$0xff]
    %v518 = vld [vmem:[#allocation5 + $0x200] sm:$0xff]
    %v519 = vld [vmem:[#allocation5 + $0x208] sm:$0xff]
    %v520 = vld [vmem:[#allocation5 + $0x210] sm:$0xff]
    %v521 = vld [vmem:[#allocation5 + $0x218] sm:$0xff]
    %v522 = vld [vmem:[#allocation5 + $0x220] sm:$0xff]
    %v523 = vld [vmem:[#allocation5 + $0x228] sm:$0xff]
    %v524 = vld [vmem:[#allocation5 + $0x230] sm:$0xff]
    %v525 = vld [vmem:[#allocation5 + $0x238] sm:$0xff]
    %v526 = vld [vmem:[#allocation5 + $0x240] sm:$0xff]
    %v527 = vld [vmem:[#allocation5 + $0x248] sm:$0xff]
    %v528 = vld [vmem:[#allocation5 + $0x250] sm:$0xff]
    %v529 = vld [vmem:[#allocation5 + $0x258] sm:$0xff]
    %v530 = vld [vmem:[#allocation5 + $0x260] sm:$0xff]
    %v531 = vld [vmem:[#allocation5 + $0x268] sm:$0xff]
    %v532 = vld [vmem:[#allocation5 + $0x270] sm:$0xff]
    %v533 = vld [vmem:[#allocation5 + $0x278] sm:$0xff]
    %v534 = vld [vmem:[#allocation5 + $0x280] sm:$0xff]
    %v535 = vld [vmem:[#allocation5 + $0x288] sm:$0xff]
    %v536 = vld [vmem:[#allocation5 + $0x290] sm:$0xff]
    %v537 = vld [vmem:[#allocation5 + $0x298] sm:$0xff]
    %v538 = vld [vmem:[#allocation5 + $0x2a0] sm:$0xff]
    %v539 = vld [vmem:[#allocation5 + $0x2a8] sm:$0xff]
    %v540 = vld [vmem:[#allocation5 + $0x2b0] sm:$0xff]
    %v541 = vld [vmem:[#allocation5 + $0x2b8] sm:$0xff]
    %v542 = vld [vmem:[#allocation5 + $0x2c0] sm:$0xff]
    %v543 = vld [vmem:[#allocation5 + $0x2c8] sm:$0xff]
    %v544 = vld [vmem:[#allocation5 + $0x2d0] sm:$0xff]
    %v545 = vld [vmem:[#allocation5 + $0x2d8] sm:$0xff]
    %v546 = vld [vmem:[#allocation5 + $0x2e0] sm:$0xff]
    %v547 = vld [vmem:[#allocation5 + $0x2e8] sm:$0xff]
    %v548 = vld [vmem:[#allocation5 + $0x2f0] sm:$0xff]
    %v549 = vld [vmem:[#allocation5 + $0x2f8] sm:$0xff]
    %v550 = vld [vmem:[#allocation5 + $0x300] sm:$0xff]
    %v551 = vld [vmem:[#allocation5 + $0x308] sm:$0xff]
    %v552 = vld [vmem:[#allocation5 + $0x310] sm:$0xff]
    %v553 = vld [vmem:[#allocation5 + $0x318] sm:$0xff]
    %v554 = vld [vmem:[#allocation5 + $0x320] sm:$0xff]
    %v555 = vld [vmem:[#allocation5 + $0x328] sm:$0xff]
    %v556 = vld [vmem:[#allocation5 + $0x330] sm:$0xff]
    %v557 = vld [vmem:[#allocation5 + $0x338] sm:$0xff]
    %v558 = vld [vmem:[#allocation5 + $0x340] sm:$0xff]
    %v559 = vld [vmem:[#allocation5 + $0x348] sm:$0xff]
    %v560 = vld [vmem:[#allocation5 + $0x350] sm:$0xff]
    %v561 = vld [vmem:[#allocation5 + $0x358] sm:$0xff]
    %v562 = vld [vmem:[#allocation5 + $0x360] sm:$0xff]
    %v563 = vld [vmem:[#allocation5 + $0x368] sm:$0xff]
    %v564 = vld [vmem:[#allocation5 + $0x370] sm:$0xff]
    %v565 = vld [vmem:[#allocation5 + $0x378] sm:$0xff]
    %v566 = vld [vmem:[#allocation5 + $0x380] sm:$0xff]
    %v567 = vld [vmem:[#allocation5 + $0x388] sm:$0xff]
    %v568 = vld [vmem:[#allocation5 + $0x390] sm:$0xff]
    %v569 = vld [vmem:[#allocation5 + $0x398] sm:$0xff]
    %v570 = vld [vmem:[#allocation5 + $0x3a0] sm:$0xff]
    %v571 = vld [vmem:[#allocation5 + $0x3a8] sm:$0xff]
    %v572 = vld [vmem:[#allocation5 + $0x3b0] sm:$0xff]
    %v573 = vld [vmem:[#allocation5 + $0x3b8] sm:$0xff]
    %v574 = vld [vmem:[#allocation5 + $0x3c0] sm:$0xff]
    %v575 = vld [vmem:[#allocation5 + $0x3c8] sm:$0xff]
    %v576 = vld [vmem:[#allocation5 + $0x3d0] sm:$0xff]
    %v577 = vld [vmem:[#allocation5 + $0x3d8] sm:$0xff]
    %v578 = vld [vmem:[#allocation5 + $0x3e0] sm:$0xff]
    %v579 = vld [vmem:[#allocation5 + $0x3e8] sm:$0xff]
    %v580 = vld [vmem:[#allocation5 + $0x3f0] sm:$0xff]
    %v581 = vld [vmem:[#allocation5 + $0x3f8] sm:$0xff]
    %v582 = vld [vmem:[%s4] sm:$0xf]
    %v584 = vlaneseq
    %v585 = vshrl.u32 %v584, 7
    %v586 = vsub.s32 0, %v585
    %v587 = vrot.slane %v582, %v586
    %v588 = vlaneseq
    %v589 = vshrl.u32 %v588, 7
    %v590 = vsub.s32 1, %v589
    %v591 = vrot.slane %v582, %v590
    %v592 = vlaneseq
    %v593 = vshrl.u32 %v592, 7
    %v594 = vsub.s32 2, %v593
    %v595 = vrot.slane %v582, %v594
    %v596 = vlaneseq
    %v597 = vshrl.u32 %v596, 7
    %v598 = vsub.s32 3, %v597
    %v599 = vrot.slane %v582, %v598
    %604 = vmatprep.subr.mxu0 %v455
    %605 = vmatpush1.msra.mxu0 %v454
    %606 = vmatprep.subr.mxu0 %v459
    %607 = vmatpush1.msra.mxu0 %v458
    %608 = vmatprep.subr.mxu0 %v463
    %609 = vmatpush1.msra.mxu0 %v462
    %610 = vmatprep.subr.mxu0 %v467
    %611 = vmatpush1.msra.mxu0 %v466
    %612 = vmatprep.subr.mxu0 %v471
    %613 = vmatpush1.msra.mxu0 %v470
    %614 = vmatprep.subr.mxu0 %v475
    %615 = vmatpush1.msra.mxu0 %v474
    %616 = vmatprep.subr.mxu0 %v479
    %617 = vmatpush1.msra.mxu0 %v478
    %618 = vmatprep.subr.mxu0 %v483
    %619 = vmatpush1.msra.mxu0 %v482
    %620 = vmatprep.subr.mxu0 %v487
    %621 = vmatpush1.msra.mxu0 %v486
    %622 = vmatprep.subr.mxu0 %v491
    %623 = vmatpush1.msra.mxu0 %v490
    %624 = vmatprep.subr.mxu0 %v495
    %625 = vmatpush1.msra.mxu0 %v494
    %626 = vmatprep.subr.mxu0 %v499
    %627 = vmatpush1.msra.mxu0 %v498
    %628 = vmatprep.subr.mxu0 %v503
    %629 = vmatpush1.msra.mxu0 %v502
    %630 = vmatprep.subr.mxu0 %v507
    %631 = vmatpush1.msra.mxu0 %v506
    %632 = vmatprep.subr.mxu0 %v511
    %633 = vmatpush1.msra.mxu0 %v510
    %634 = vmatprep.subr.mxu0 %v515
    %635 = vmatpush1.msra.mxu0 %v514
    %636 = vmatprep.subr.mxu0 %v519
    %637 = vmatpush1.msra.mxu0 %v518
    %638 = vmatprep.subr.mxu0 %v523
    %639 = vmatpush1.msra.mxu0 %v522
    %640 = vmatprep.subr.mxu0 %v527
    %641 = vmatpush1.msra.mxu0 %v526
    %642 = vmatprep.subr.mxu0 %v531
    %643 = vmatpush1.msra.mxu0 %v530
    %644 = vmatprep.subr.mxu0 %v535
    %645 = vmatpush1.msra.mxu0 %v534
    %646 = vmatprep.subr.mxu0 %v539
    %647 = vmatpush1.msra.mxu0 %v538
    %648 = vmatprep.subr.mxu0 %v543
    %649 = vmatpush1.msra.mxu0 %v542
    %650 = vmatprep.subr.mxu0 %v547
    %651 = vmatpush1.msra.mxu0 %v546
    %652 = vmatprep.subr.mxu0 %v551
    %653 = vmatpush1.msra.mxu0 %v550
    %654 = vmatprep.subr.mxu0 %v555
    %655 = vmatpush1.msra.mxu0 %v554
    %656 = vmatprep.subr.mxu0 %v559
    %657 = vmatpush1.msra.mxu0 %v558
    %658 = vmatprep.subr.mxu0 %v563
    %659 = vmatpush1.msra.mxu0 %v562
    %660 = vmatprep.subr.mxu0 %v567
    %661 = vmatpush1.msra.mxu0 %v566
    %662 = vmatprep.subr.mxu0 %v571
    %663 = vmatpush1.msra.mxu0 %v570
    %664 = vmatprep.subr.mxu0 %v575
    %665 = vmatpush1.msra.mxu0 %v574
    %666 = vmatprep.subr.mxu0 %v579
    %667 = vmatpush1.msra.mxu0 %v578
    %668 = vmatprep.mubr.f32.mxu0 %v453
    %669 = vmatmul.mubr.f32.gmra.mrb[0].mxu0 %v452
    %v670 = vpop.f32.mrb[0].mxu0
    %v671 = vadd.f32 %v587, %v670
    %v672 = vpop.f32.mrb[0].mxu0
    %v673 = vadd.f32 %v591, %v672
    %674 = vdwg.mxu0
    %675 = vmatprep.subr.mxu0 %v457
    %676 = vmatpush1.msra.mxu0 %v456
    %677 = vmatprep.subr.mxu0 %v461
    %678 = vmatpush1.msra.mxu0 %v460
    %679 = vmatprep.subr.mxu0 %v465
    %680 = vmatpush1.msra.mxu0 %v464
    %681 = vmatprep.subr.mxu0 %v469
    %682 = vmatpush1.msra.mxu0 %v468
    %683 = vmatprep.subr.mxu0 %v473
    %684 = vmatpush1.msra.mxu0 %v472
    %685 = vmatprep.subr.mxu0 %v477
    %686 = vmatpush1.msra.mxu0 %v476
    %687 = vmatprep.subr.mxu0 %v481
    %688 = vmatpush1.msra.mxu0 %v480
    %689 = vmatprep.subr.mxu0 %v485
    %690 = vmatpush1.msra.mxu0 %v484
    %691 = vmatprep.subr.mxu0 %v489
    %692 = vmatpush1.msra.mxu0 %v488
    %693 = vmatprep.subr.mxu0 %v493
    %694 = vmatpush1.msra.mxu0 %v492
    %695 = vmatprep.subr.mxu0 %v497
    %696 = vmatpush1.msra.mxu0 %v496
    %697 = vmatprep.subr.mxu0 %v501
    %698 = vmatpush1.msra.mxu0 %v500
    %699 = vmatprep.subr.mxu0 %v505
    %700 = vmatpush1.msra.mxu0 %v504
    %701 = vmatprep.subr.mxu0 %v509
    %702 = vmatpush1.msra.mxu0 %v508
    %703 = vmatprep.subr.mxu0 %v513
    %704 = vmatpush1.msra.mxu0 %v512
    %705 = vmatprep.subr.mxu0 %v517
    %706 = vmatpush1.msra.mxu0 %v516
    %707 = vmatprep.subr.mxu0 %v521
    %708 = vmatpush1.msra.mxu0 %v520
    %709 = vmatprep.subr.mxu0 %v525
    %710 = vmatpush1.msra.mxu0 %v524
    %711 = vmatprep.subr.mxu0 %v529
    %712 = vmatpush1.msra.mxu0 %v528
    %713 = vmatprep.subr.mxu0 %v533
    %714 = vmatpush1.msra.mxu0 %v532
    %715 = vmatprep.subr.mxu0 %v537
    %716 = vmatpush1.msra.mxu0 %v536
    %717 = vmatprep.subr.mxu0 %v541
    %718 = vmatpush1.msra.mxu0 %v540
    %719 = vmatprep.subr.mxu0 %v545
    %720 = vmatpush1.msra.mxu0 %v544
    %721 = vmatprep.subr.mxu0 %v549
    %722 = vmatpush1.msra.mxu0 %v548
    %723 = vmatprep.subr.mxu0 %v553
    %724 = vmatpush1.msra.mxu0 %v552
    %725 = vmatprep.subr.mxu0 %v557
    %726 = vmatpush1.msra.mxu0 %v556
    %727 = vmatprep.subr.mxu0 %v561
    %728 = vmatpush1.msra.mxu0 %v560
    %729 = vmatprep.subr.mxu0 %v565
    %730 = vmatpush1.msra.mxu0 %v564
    %731 = vmatprep.subr.mxu0 %v569
    %732 = vmatpush1.msra.mxu0 %v568
    %733 = vmatprep.subr.mxu0 %v573
    %734 = vmatpush1.msra.mxu0 %v572
    %735 = vmatprep.subr.mxu0 %v577
    %736 = vmatpush1.msra.mxu0 %v576
    %737 = vmatprep.subr.mxu0 %v581
    %738 = vmatpush1.msra.mxu0 %v580
    %739 = vmatprep.mubr.f32.mxu0 %v453
    %740 = vmatmul.mubr.f32.gmra.mrb[0].mxu0 %v452
    %v741 = vpop.f32.mrb[0].mxu0
    %v742 = vadd.f32 %v595, %v741
    %v743 = vpop.f32.mrb[0].mxu0
    %v744 = vadd.f32 %v599, %v743
    %745 = vdwg.mxu0
    %v746 = vmax.f32 %v671, 0.0
    %v747 = vmax.f32 %v673, 0.0
    %v748 = vmax.f32 %v742, 0.0
    %v749 = vmax.f32 %v744, 0.0
    %v750 = vmax.f32 %v746, %v748
    %v751 = vmax.f32 %v747, %v749
    %v752 = vmax.f32 %v750, %v751
    %v753 = vld [vmem:[%s5] sm:$0xff]
    %v754 = vld [vmem:[%s5 + $0x8] sm:$0xff]
    %v755 = vld [vmem:[%s5 + $0x10] sm:$0xff]
    %v756 = vld [vmem:[%s5 + $0x18] sm:$0xff]
    %v757 = vld [vmem:[%s5 + $0x20] sm:$0xff]
    %v758 = vld [vmem:[%s5 + $0x28] sm:$0xff]
    %v759 = vld [vmem:[%s5 + $0x30] sm:$0xff]
    %v760 = vld [vmem:[%s5 + $0x38] sm:$0xff]
    %v761 = vld [vmem:[%s5 + $0x40] sm:$0xff]
    %v762 = vld [vmem:[%s5 + $0x48] sm:$0xff]
    %v763 = vld [vmem:[%s5 + $0x50] sm:$0xff]
    %v764 = vld [vmem:[%s5 + $0x58] sm:$0xff]
    %v765 = vld [vmem:[%s5 + $0x60] sm:$0xff]
    %v766 = vld [vmem:[%s5 + $0x68] sm:$0xff]
    %v767 = vld [vmem:[%s5 + $0x70] sm:$0xff]
    %v768 = vld [vmem:[%s5 + $0x78] sm:$0xff]
    %v769 = vld [vmem:[%s6] sm:$0x1]
    %v771 = vlaneseq
    %v772 = vshrl.u32 %v771, 7
    %v773 = vsub.s32 0, %v772
    %v774 = vrot.slane %v769, %v773
    %776 = vmatprep.subr.mxu0 0.0
    %777 = vmatpush1.msra.mxu0 %v753
    %778 = vmatprep.subr.mxu0 0.0
    %779 = vmatpush1.msra.mxu0 %v754
    %780 = vmatprep.subr.mxu0 0.0
    %781 = vmatpush1.msra.mxu0 %v755
    %782 = vmatprep.subr.mxu0 0.0
    %783 = vmatpush1.msra.mxu0 %v756
    %784 = vmatprep.subr.mxu0 0.0
    %785 = vmatpush1.msra.mxu0 %v757
    %786 = vmatprep.subr.mxu0 0.0
    %787 = vmatpush1.msra.mxu0 %v758
    %788 = vmatprep.subr.mxu0 0.0
    %789 = vmatpush1.msra.mxu0 %v759
    %790 = vmatprep.subr.mxu0 0.0
    %791 = vmatpush1.msra.mxu0 %v760
    %792 = vmatprep.subr.mxu0 0.0
    %793 = vmatpush1.msra.mxu0 %v761
    %794 = vmatprep.subr.mxu0 0.0
    %795 = vmatpush1.msra.mxu0 %v762
    %796 = vmatprep.subr.mxu0 0.0
    %797 = vmatpush1.msra.mxu0 %v763
    %798 = vmatprep.subr.mxu0 0.0
    %799 = vmatpush1.msra.mxu0 %v764
    %800 = vmatprep.subr.mxu0 0.0
    %801 = vmatpush1.msra.mxu0 %v765
    %802 = vmatprep.subr.mxu0 0.0
    %803 = vmatpush1.msra.mxu0 %v766
    %804 = vmatprep.subr.mxu0 0.0
    %805 = vmatpush1.msra.mxu0 %v767
    %806 = vmatprep.subr.mxu0 0.0
    %807 = vmatpush1.msra.mxu0 %v768
    %808 = vmatprep.subr.mxu0 0.0
    %809 = vmatpush1.msra.mxu0 0.0
    %810 = vmatprep.subr.mxu0 0.0
    %811 = vmatpush1.msra.mxu0 0.0
    %812 = vmatprep.subr.mxu0 0.0
    %813 = vmatpush1.msra.mxu0 0.0
    %814 = vmatprep.subr.mxu0 0.0
    %815 = vmatpush1.msra.mxu0 0.0
    %816 = vmatprep.subr.mxu0 0.0
    %817 = vmatpush1.msra.mxu0 0.0
    %818 = vmatprep.subr.mxu0 0.0
    %819 = vmatpush1.msra.mxu0 0.0
    %820 = vmatprep.subr.mxu0 0.0
    %821 = vmatpush1.msra.mxu0 0.0
    %822 = vmatprep.subr.mxu0 0.0
    %823 = vmatpush1.msra.mxu0 0.0
    %824 = vmatprep.subr.mxu0 0.0
    %825 = vmatpush1.msra.mxu0 0.0
    %826 = vmatprep.subr.mxu0 0.0
    %827 = vmatpush1.msra.mxu0 0.0
    %828 = vmatprep.subr.mxu0 0.0
    %829 = vmatpush1.msra.mxu0 0.0
    %830 = vmatprep.subr.mxu0 0.0
    %831 = vmatpush1.msra.mxu0 0.0
    %832 = vmatprep.subr.mxu0 0.0
    %833 = vmatpush1.msra.mxu0 0.0
    %834 = vmatprep.subr.mxu0 0.0
    %835 = vmatpush1.msra.mxu0 0.0
    %836 = vmatprep.subr.mxu0 0.0
    %837 = vmatpush1.msra.mxu0 0.0
    %838 = vmatprep.subr.mxu0 0.0
    %839 = vmatpush1.msra.mxu0 0.0
    %840 = vmatprep.mubr.f32.mxu0 0.0
    %841 = vmatmul.mubr.f32.gmra.mrb[0].mxu0 %v752
    %v842 = vpop.f32.mrb[0].mxu0
    %v843 = vadd.f32 %v774, %v842
    %v844 = vpop.f32.mrb[0].mxu0
    %845 = vdwg.mxu0
    %v846 = vmax.f32 %v843, 0.0
    %v847 = vld [vmem:[%s7] sm:$0xff]
    %v848 = vld [vmem:[%s7 + $0x8] sm:$0xff]
    %v849 = vld [vmem:[%s7 + $0x10] sm:$0xff]
    %v850 = vld [vmem:[%s7 + $0x18] sm:$0xff]
    %v851 = vld [vmem:[%s7 + $0x20] sm:$0xff]
    %v852 = vld [vmem:[%s7 + $0x28] sm:$0xff]
    %v853 = vld [vmem:[%s7 + $0x30] sm:$0xff]
    %v854 = vld [vmem:[%s7 + $0x38] sm:$0xff]
    %v855 = vld [vmem:[%s7 + $0x40] sm:$0xff]
    %v856 = vld [vmem:[%s7 + $0x48] sm:$0xff]
    %v857 = vld [vmem:[%s7 + $0x50] sm:$0xff]
    %v858 = vld [vmem:[%s7 + $0x58] sm:$0xff]
    %v859 = vld [vmem:[%s7 + $0x60] sm:$0xff]
    %v860 = vld [vmem:[%s7 + $0x68] sm:$0xff]
    %v861 = vld [vmem:[%s7 + $0x70] sm:$0xff]
    %v862 = vld [vmem:[%s7 + $0x78] sm:$0xff]
    %v863 = vld [vmem:[%s8] sm:$0x1]
    %v865 = vlaneseq
    %v866 = vshrl.u32 %v865, 7
    %v867 = vsub.s32 0, %v866
    %v868 = vrot.slane %v863, %v867
    %870 = vmatprep.subr.mxu0 0.0
    %871 = vmatpush1.msra.mxu0 %v847
    %872 = vmatprep.subr.mxu0 0.0
    %873 = vmatpush1.msra.mxu0 %v848
    %874 = vmatprep.subr.mxu0 0.0
    %875 = vmatpush1.msra.mxu0 %v849
    %876 = vmatprep.subr.mxu0 0.0
    %877 = vmatpush1.msra.mxu0 %v850
    %878 = vmatprep.subr.mxu0 0.0
    %879 = vmatpush1.msra.mxu0 %v851
    %880 = vmatprep.subr.mxu0 0.0
    %881 = vmatpush1.msra.mxu0 %v852
    %882 = vmatprep.subr.mxu0 0.0
    %883 = vmatpush1.msra.mxu0 %v853
    %884 = vmatprep.subr.mxu0 0.0
    %885 = vmatpush1.msra.mxu0 %v854
    %886 = vmatprep.subr.mxu0 0.0
    %887 = vmatpush1.msra.mxu0 %v855
    %888 = vmatprep.subr.mxu0 0.0
    %889 = vmatpush1.msra.mxu0 %v856
    %890 = vmatprep.subr.mxu0 0.0
    %891 = vmatpush1.msra.mxu0 %v857
    %892 = vmatprep.subr.mxu0 0.0
    %893 = vmatpush1.msra.mxu0 %v858
    %894 = vmatprep.subr.mxu0 0.0
    %895 = vmatpush1.msra.mxu0 %v859
    %896 = vmatprep.subr.mxu0 0.0
    %897 = vmatpush1.msra.mxu0 %v860
    %898 = vmatprep.subr.mxu0 0.0
    %899 = vmatpush1.msra.mxu0 %v861
    %900 = vmatprep.subr.mxu0 0.0
    %901 = vmatpush1.msra.mxu0 %v862
    %902 = vmatprep.subr.mxu0 0.0
    %903 = vmatpush1.msra.mxu0 0.0
    %904 = vmatprep.subr.mxu0 0.0
    %905 = vmatpush1.msra.mxu0 0.0
    %906 = vmatprep.subr.mxu0 0.0
    %907 = vmatpush1.msra.mxu0 0.0
    %908 = vmatprep.subr.mxu0 0.0
    %909 = vmatpush1.msra.mxu0 0.0
    %910 = vmatprep.subr.mxu0 0.0
    %911 = vmatpush1.msra.mxu0 0.0
    %912 = vmatprep.subr.mxu0 0.0
    %913 = vmatpush1.msra.mxu0 0.0
    %914 = vmatprep.subr.mxu0 0.0
    %915 = vmatpush1.msra.mxu0 0.0
    %916 = vmatprep.subr.mxu0 0.0
    %917 = vmatpush1.msra.mxu0 0.0
    %918 = vmatprep.subr.mxu0 0.0
    %919 = vmatpush1.msra.mxu0 0.0
    %920 = vmatprep.subr.mxu0 0.0
    %921 = vmatpush1.msra.mxu0 0.0
    %922 = vmatprep.subr.mxu0 0.0
    %923 = vmatpush1.msra.mxu0 0.0
    %924 = vmatprep.subr.mxu0 0.0
    %925 = vmatpush1.msra.mxu0 0.0
    %926 = vmatprep.subr.mxu0 0.0
    %927 = vmatpush1.msra.mxu0 0.0
    %928 = vmatprep.subr.mxu0 0.0
    %929 = vmatpush1.msra.mxu0 0.0
    %930 = vmatprep.subr.mxu0 0.0
    %931 = vmatpush1.msra.mxu0 0.0
    %932 = vmatprep.subr.mxu0 0.0
    %933 = vmatpush1.msra.mxu0 0.0
    %934 = vmatprep.mubr.f32.mxu0 0.0
    %935 = vmatmul.mubr.f32.gmra.mrb[0].mxu0 %v846
    %v936 = vpop.f32.mrb[0].mxu0
    %v937 = vadd.f32 %v868, %v936
    %v938 = vpop.f32.mrb[0].mxu0
    %939 = vdwg.mxu0
    %vm940 = vcmask 64512
    %941 = vst.msk [vmem:[#allocation7] sm:$0xff] %vm940, %v937
    // Predicated region
    $region46: #{tpu_custom_call.1} parent=1 // pred_check
      _
    $region47: #{tpu_custom_call.1} parent=1 // pred_check_branch
      %943 = sbr.rel (0) target = $region49
    $region48: #{tpu_custom_call.1} parent=1 // pred_region
      %s945 = ssub.s32 128, 128
      %946 = vsyncadd [#allocation4], %s945
      %s948 = sshll.u32 [#allocation7], 4
      %s949 = int_to_ptr.vmem [resolvable:$true] %s948
      %951 = dma.vmem_to_hbm [thread:$0]  %s949, 128, %s9, [#allocation4]
    $region49: #{tpu_custom_call.1} parent=1 // pred_fallthru
      _
    // Predicated region
    $region50: #{tpu_custom_call.1} parent=1 // pred_check
      _
    $region51: #{tpu_custom_call.1} parent=1 // pred_check_branch
      %953 = sbr.rel (0) target = $region53
    $region52: #{tpu_custom_call.1} parent=1 // pred_region
      %954 = dma.done [#allocation4], 128
    $region53: #{tpu_custom_call.1} parent=1 // pred_fallthru
      _
    %955 = vsyncpa [#allocation3], 1
    %956 = vsyncpa [#allocation6], 1
    %957 = vsyncpa [#allocation4], 1

</llo_original>
